<compile_context>
chip_gen: v7x
topology: tpu7x:2x2x1
jax: 0.10.0
libtpu: 0.0.40
codegen_flags: <defaults>
</compile_context>

<pallas_src>
import functools

import jax
import jax.numpy as jnp
from jax.experimental import pallas as pl
from jax.experimental.pallas import tpu as pltpu


def _round_up(x: int, m: int) -> int:
    return ((x + m - 1) // m) * m


def _round_down(x: int, m: int) -> int:
    return (x // m) * m


def _cdiv(a: int, b: int) -> int:
    return (a + b - 1) // b


def _tpu_generation() -> str:
    try:
        kind = jax.devices()[0].device_kind.lower()
    except Exception:
        kind = ""
    if "v5 lite" in kind or "v5e" in kind or "v5litepod" in kind:
        return "v5e"
    if "v6" in kind:
        return "v6e"
    if "v7" in kind:
        return "v7x"
    return "other"


# generation -> (target HBM bytes per x tile, scoped-VMEM limit to request)
_TILE_POLICY = {
    "v5e": (6 << 20, 64 << 20),    # ~0.8 TB/s HBM; 128 MiB physical VMEM
    "v6e": (8 << 20, 64 << 20),    # ~1.4 TB/s HBM; 128 MiB physical VMEM
    "v7x": (14 << 20, 48 << 20),   # ~3.2 TB/s HBM; only 64 MiB physical VMEM
    "other": (8 << 20, 64 << 20),
}


def _plain_lr_kernel(x_ref, w_ref, b_ref, o_ref, *, use_mxu: bool):
    # x_ref: (TB, K) VMEM, w_ref: (K, R) or (1, K) VMEM, b_ref: (1,1) SMEM,
    # o_ref: (TB, R) VMEM.
    x = x_ref[...]
    if use_mxu:
        # Lane-packed path: K == 128, block-diagonal weight (128, R).
        z = jnp.dot(x, w_ref[...], preferred_element_type=jnp.float32)
    else:
        # N=1 matvec: VPU multiply + XLU lane reduce, natural layout, MXU idle.
        z = jnp.sum(x * w_ref[...], axis=-1, keepdims=True)
    z = z + b_ref[0, 0]                       # scalar bias add (SMEM, no DMA)
    o_ref[...] = jax.nn.sigmoid(z).astype(o_ref.dtype)


@functools.partial(jax.jit, static_argnames=("max_block_rows",))
def plain_lr_forward(x, w, b, *, max_block_rows=None):
    """x: (B, D) f32, w: (D, 1) f32, b: (1, 1) f32 -> (B, 1) f32."""
    B, D = x.shape
    gen = _tpu_generation()
    target_tile_bytes, vmem_limit = _TILE_POLICY[gen]

    # ---- optional lane packing: (B, D) -> (B*D/128, 128), free reshape ----
    R = 128 // D if (D < 128 and 128 % D == 0) else 1
    if R > 1 and B % R != 0:
        R = 1                                  # keep it copy-free: no padding
    if R > 1:
        xk = x.reshape(B // R, 128)
        # Block-diagonal weight: packed_row @ wk gives R per-row dot products.
        wk = jnp.kron(jnp.eye(R, dtype=jnp.float32), w.reshape(D, 1))  # (128, R)
        use_mxu = True
    else:
        xk = x
        wk = w.reshape(1, D)                   # lane-dense weight row
        use_mxu = False
    Brows, K = xk.shape

    # ---- byte-based tile sizing (accounts for VMEM lane padding) ----
    in_row_vmem = _round_up(K, 128) * 4        # input row footprint in VMEM
    out_row_vmem = _round_up(R, 128) * 4       # output row footprint in VMEM
    w_vmem = _round_up(wk.shape[0], 8) * _round_up(wk.shape[1], 128) * 4

    vmem_budget = int(vmem_limit * 0.85) - 2 * w_vmem - (1 << 20)
    tb_vmem = max(8, vmem_budget // (2 * (in_row_vmem + out_row_vmem)))
    tb_hbm = max(8, target_tile_bytes // (K * 4))
    TB = min(tb_vmem, tb_hbm)
    if max_block_rows is not None:
        TB = min(TB, int(max_block_rows))
    if gen == "v7x" and Brows >= 16:
        # >= 2 tiles so the "parallel" axis can be sharded across both TCs.
        TB = min(TB, _cdiv(Brows, 2))
    if TB >= Brows:
        TB = Brows                             # one block spanning the batch
    else:
        TB = max(8, _round_down(TB, 8))        # interior blocks sublane-aligned
    grid = (_cdiv(Brows, TB),)                 # partial last block handled by Pallas

    cost = pl.CostEstimate(
        flops=2 * Brows * K * R,
        transcendentals=Brows * R,
        bytes_accessed=Brows * K * 4 + Brows * R * 4 + K * R * 4 + 4,
    )

    kernel = functools.partial(_plain_lr_kernel, use_mxu=use_mxu)

    out = pl.pallas_call(
        kernel,
        out_shape=jax.ShapeDtypeStruct((Brows, R), jnp.float32),
        grid=grid,
        in_specs=[
            # Streamed batch tiles of x (double-buffered by Pallas).
            pl.BlockSpec((TB, K), lambda i: (i, 0)),
            # Grid-invariant weight, resident in VMEM.
            pl.BlockSpec((wk.shape[0], wk.shape[1]), lambda i: (0, 0)),
            # Bias as an SMEM scalar.
            pl.BlockSpec(memory_space=pltpu.MemorySpace.SMEM),
        ],
        out_specs=pl.BlockSpec((TB, R), lambda i: (i, 0)),
        compiler_params=pltpu.CompilerParams(
            dimension_semantics=("parallel",),
            vmem_limit_bytes=vmem_limit,
        ),
        cost_estimate=cost,
    )(xk, wk, b)

    return out.reshape(B, 1)


if __name__ == "__main__":
    key = jax.random.PRNGKey(0)
    k_x, k_w, k_b, k_x2, k_x3, k_w3, k_b3 = jax.random.split(key, 7)

    # --- case 1: tiny shape matching typical module usage (packed path, D=32)
    batch, input_size = 8, 32
    bound = 1.0 / (input_size ** 0.5)          # PyTorch nn.Linear-style init
    w = jax.random.uniform(k_w, (input_size, 1), jnp.float32, -bound, bound)
    b = jax.random.uniform(k_b, (1, 1), jnp.float32, -bound, bound)
    x = jax.random.normal(k_x, (batch, input_size), dtype=jnp.float32)

    out = plain_lr_forward(x, w, b)
    jax.block_until_ready(out)
    ref = jax.nn.sigmoid(x @ w + b)
    assert out.shape == (batch, 1)
    assert jnp.allclose(out, ref, atol=1e-5), "mismatch vs reference (small)"

    # --- case 2: multi-tile + ragged (partial last block) on the packed path
    big_batch = 200                            # 50 packed rows -> 4 tiles of 16
    x2 = jax.random.normal(k_x2, (big_batch, input_size), dtype=jnp.float32)
    out2 = plain_lr_forward(x2, w, b, max_block_rows=16)
    jax.block_until_ready(out2)
    ref2 = jax.nn.sigmoid(x2 @ w + b)
    assert out2.shape == (big_batch, 1)
    assert jnp.allclose(out2, ref2, atol=1e-5), "mismatch vs reference (tiled)"

    # --- case 3: unpacked VPU/XLU path (128 % D != 0) + ragged batch
    batch3, d3 = 37, 40
    bound3 = 1.0 / (d3 ** 0.5)
    w3 = jax.random.uniform(k_w3, (d3, 1), jnp.float32, -bound3, bound3)
    b3 = jax.random.uniform(k_b3, (1, 1), jnp.float32, -bound3, bound3)
    x3 = jax.random.normal(k_x3, (batch3, d3), dtype=jnp.float32)
    out3 = plain_lr_forward(x3, w3, b3, max_block_rows=16)
    jax.block_until_ready(out3)
    ref3 = jax.nn.sigmoid(x3 @ w3 + b3)
    assert out3.shape == (batch3, 1)
    assert jnp.allclose(out3, ref3, atol=1e-5), "mismatch vs reference (vpu path)"

    print("KERNEL_OK")
</pallas_src>

<mosaic_0001>
module attributes {stable_mosaic.version = 11 : i64} {
  func.func @_plain_lr_kernel(%arg0: i32, %arg1: memref<2x128xf32, #tpu.memory_space<vmem>>, %arg2: memref<128x4xf32, #tpu.memory_space<vmem>>, %arg3: memref<1x1xf32, #tpu.memory_space<smem>>, %arg4: memref<2x4xf32, #tpu.memory_space<vmem>>) attributes {dimension_semantics = [#tpu.dimension_semantics<parallel>], iteration_bounds = array<i64: 1>, scalar_prefetch = 0 : i64, scratch_operands = 0 : i64, tpu.core_type = #tpu.core_type<tc>, window_params = [{transform_indices = @transform_0, window_bounds = array<i64: 2, 128>}, {pipeline_mode = #tpu.pipeline_mode<synchronous>, transform_indices = @transform_1, window_bounds = array<i64: 128, 4>}, {transform_indices = @transform_2, window_bounds = array<i64: 1, 1>}, {transform_indices = @transform_3, window_bounds = array<i64: 2, 4>}]} {
    %c0 = arith.constant 0 : index
    %c0_0 = arith.constant 0 : index
    %0 = vector.load %arg1[%c0, %c0_0] : memref<2x128xf32, #tpu.memory_space<vmem>>, vector<2x128xf32>
    %c0_1 = arith.constant 0 : index
    %c0_2 = arith.constant 0 : index
    %1 = vector.load %arg2[%c0_1, %c0_2] : memref<128x4xf32, #tpu.memory_space<vmem>>, vector<128x4xf32>
    %cst = arith.constant dense<0.000000e+00> : vector<2x4xf32>
    %2 = tpu.matmul %0, %1, %cst {dimension_numbers = #tpu.dot_dimension_numbers<[1], [0], [0], [1], [0, 0, 1, 1], [], []>} : vector<2x128xf32>, vector<128x4xf32>, vector<2x4xf32> -> vector<2x4xf32>
    %c0_3 = arith.constant 0 : index
    %c0_4 = arith.constant 0 : index
    %3 = memref.load %arg3[%c0_3, %c0_4] : memref<1x1xf32, #tpu.memory_space<smem>>
    %4 = vector.broadcast %3 : f32 to vector<2x4xf32>
    %5 = arith.addf %2, %4 : vector<2x4xf32>
    %6 = arith.negf %5 : vector<2x4xf32>
    %7 = math.exp %6 : vector<2x4xf32>
    %cst_5 = arith.constant 1.000000e+00 : f32
    %8 = vector.broadcast %cst_5 : f32 to vector<2x4xf32>
    %9 = arith.addf %8, %7 : vector<2x4xf32>
    %10 = arith.divf %8, %9 : vector<2x4xf32>
    %c0_6 = arith.constant 0 : index
    %c0_7 = arith.constant 0 : index
    %11 = vector.load %arg4[%c0_6, %c0_7] : memref<2x4xf32, #tpu.memory_space<vmem>>, vector<2x4xf32>
    tpu.vector_store %arg4[%c0_6, %c0_7], %10 {strides = array<i32>} : memref<2x4xf32, #tpu.memory_space<vmem>>, vector<2x4xf32>,
    return
  }
  func.func @transform_0(%arg0: i32) -> (i32, i32) {
    %c0_i32 = arith.constant 0 : i32
    %c0_i32_0 = arith.constant 0 : i32
    return %arg0, %c0_i32 : i32, i32
  }
  func.func @transform_1(%arg0: i32) -> (i32, i32) {
    %c0_i32 = arith.constant 0 : i32
    %c0_i32_0 = arith.constant 0 : i32
    %c0_i32_1 = arith.constant 0 : i32
    return %c0_i32, %c0_i32_0 : i32, i32
  }
  func.func @transform_2(%arg0: i32) -> (i32, i32) {
    %c0_i32 = arith.constant 0 : i32
    %c0_i32_0 = arith.constant 0 : i32
    %c0_i32_1 = arith.constant 0 : i32
    return %c0_i32, %c0_i32_0 : i32, i32
  }
  func.func @transform_3(%arg0: i32) -> (i32, i32) {
    %c0_i32 = arith.constant 0 : i32
    %c0_i32_0 = arith.constant 0 : i32
    return %arg0, %c0_i32 : i32, i32
  }
}

</mosaic_0001>

<llo_original>
// kernel: plain_lr_forward.1
$region0: #{plain_lr_forward.1}
  #allocation0 [shape = 'u32[]', space=smem, size = 0x4, offset = 0x4, fixed_abs, tag = 'smem constant byte address 0x4 - core index']
  #allocation1 [shape = 'u32[144,128]{1,0:T(1,128)}', space=vmem, size = 0x12000, scoped, tag = 'internal scratch']
  #allocation2 [shape = 'f32[1,1]{1,0:T(1,128)S(6)}', space=smem, size = 0x200, scoped, tag = 'scoped memory for plain_lr_forward.1']
  %s0 = inlined_call_operand.hbm [shape: f32[2,128], index: 0, kind: input, shape index: {}]
  %s1 = inlined_call_operand.hbm [shape: f32[128,4], index: 1, kind: input, shape index: {}]
  %s2 = inlined_call_operand.<no memory space> [shape: f32[1,1], index: 2, kind: input, shape index: {}]
  %s3 = inlined_call_operand.hbm [shape: f32[2,4], index: 3, kind: output, shape index: {}]
  %s4 = sld [smem:[#allocation0]]
  $region30: #{plain_lr_forward.1} parent=0
    _
  %s6 = ssub.s32 1, %s4
  %s7 = scalar_select 0, %s6, %s4
  %8 = sst [smem:[#allocation2]] %s2
  $region1: #{plain_lr_forward.1} parent=0
    #allocation3 [shape = 'u8[1024]{0}', space=vmem, size = 0x400, scoped, tag = 'input window, operand 0, single buffered']
    #allocation4 [shape = 's32[1]{0}', space=sflag, size = 0x4, scoped, tag = 'scoped memory for plain_lr_forward.1']
    #allocation5 [shape = 's32[1]{0}', space=sflag, size = 0x4, scoped, tag = 'scoped memory for plain_lr_forward.1']
    #allocation6 [shape = 'u8[65536]{0}', space=vmem, size = 0x10000, scoped, tag = 'input window, operand 1, single buffered']
    #allocation7 [shape = 's32[1]{0}', space=sflag, size = 0x4, scoped, tag = 'scoped memory for plain_lr_forward.1']
    #allocation8 [shape = 'u8[1024]{0}', space=vmem, size = 0x400, scoped, tag = 'output window, operand 0, single buffered']
    %9 = vsyncpa [#allocation4], 0
    %10 = vsyncpa [#allocation7], 0
    %11 = vsyncpa [#allocation5], 0
    // Predicated region
    $region2: #{plain_lr_forward.1} parent=1 // pred_check
      _
    $region3: #{plain_lr_forward.1} parent=1 // pred_check_branch
      %13 = sbr.rel (0) target = $region5
    $region4: #{plain_lr_forward.1} parent=1 // pred_region
      %s15 = ssub.s32 32, 32
      %16 = vsyncadd [#allocation4], %s15
      %s18 = sshll.u32 [#allocation3], 4
      %s19 = int_to_ptr.vmem [resolvable:$true] %s18
      %21 = dma.hbm_to_vmem [thread:$0]  %s0, 32, %s19, [#allocation4]
    $region5: #{plain_lr_forward.1} parent=1 // pred_fallthru
      _
    // Predicated region
    $region6: #{plain_lr_forward.1} parent=1 // pred_check
      _
    $region7: #{plain_lr_forward.1} parent=1 // pred_check_branch
      %23 = sbr.rel (0) target = $region9
    $region8: #{plain_lr_forward.1} parent=1 // pred_region
      %s25 = ssub.s32 2048, 2048
      %26 = vsyncadd [#allocation7], %s25
      %s27 = sshll.u32 [#allocation6], 4
      %s28 = int_to_ptr.vmem [resolvable:$true] %s27
      %33 = dma.hbm_to_vmem [thread:$0]  %s1, 2048, %s28, [#allocation7], 128, 128, 8
    $region9: #{plain_lr_forward.1} parent=1 // pred_fallthru
      _
    // Predicated region
    $region10: #{plain_lr_forward.1} parent=1 // pred_check
      _
    $region11: #{plain_lr_forward.1} parent=1 // pred_check_branch
      %35 = sbr.rel (0) target = $region13
    $region12: #{plain_lr_forward.1} parent=1 // pred_region
      _
    $region13: #{plain_lr_forward.1} parent=1 // pred_fallthru
      _
    // Predicated region
    $region14: #{plain_lr_forward.1} parent=1 // pred_check
      _
    $region15: #{plain_lr_forward.1} parent=1 // pred_check_branch
      %37 = sbr.rel (0) target = $region17
    $region16: #{plain_lr_forward.1} parent=1 // pred_region
      %38 = dma.done [#allocation4], 32
    $region17: #{plain_lr_forward.1} parent=1 // pred_fallthru
      _
    // Predicated region
    $region18: #{plain_lr_forward.1} parent=1 // pred_check
      _
    $region19: #{plain_lr_forward.1} parent=1 // pred_check_branch
      %40 = sbr.rel (0) target = $region21
    $region20: #{plain_lr_forward.1} parent=1 // pred_region
      %41 = dma.done [#allocation7], 2048
    $region21: #{plain_lr_forward.1} parent=1 // pred_fallthru
      _
    %v42 = vld [vmem:[#allocation3] sm:$0x3]
    %v43 = vld [vmem:[#allocation6] sm:$0xff]
    %v44 = vld [vmem:[#allocation6 + $0x8] sm:$0xff]
    %v45 = vld [vmem:[#allocation6 + $0x10] sm:$0xff]
    %v46 = vld [vmem:[#allocation6 + $0x18] sm:$0xff]
    %v47 = vld [vmem:[#allocation6 + $0x20] sm:$0xff]
    %v48 = vld [vmem:[#allocation6 + $0x28] sm:$0xff]
    %v49 = vld [vmem:[#allocation6 + $0x30] sm:$0xff]
    %v50 = vld [vmem:[#allocation6 + $0x38] sm:$0xff]
    %v51 = vld [vmem:[#allocation6 + $0x40] sm:$0xff]
    %v52 = vld [vmem:[#allocation6 + $0x48] sm:$0xff]
    %v53 = vld [vmem:[#allocation6 + $0x50] sm:$0xff]
    %v54 = vld [vmem:[#allocation6 + $0x58] sm:$0xff]
    %v55 = vld [vmem:[#allocation6 + $0x60] sm:$0xff]
    %v56 = vld [vmem:[#allocation6 + $0x68] sm:$0xff]
    %v57 = vld [vmem:[#allocation6 + $0x70] sm:$0xff]
    %v58 = vld [vmem:[#allocation6 + $0x78] sm:$0xff]
    %s59 = sld [smem:[#allocation2]]
    %v60 = vstv %s59
    %61 = vmatprep.subr.mxu0 0.0
    %62 = vmatpush1.msra.mxu0 %v43
    %63 = vmatprep.subr.mxu0 0.0
    %64 = vmatpush1.msra.mxu0 %v44
    %65 = vmatprep.subr.mxu0 0.0
    %66 = vmatpush1.msra.mxu0 %v45
    %67 = vmatprep.subr.mxu0 0.0
    %68 = vmatpush1.msra.mxu0 %v46
    %69 = vmatprep.subr.mxu0 0.0
    %70 = vmatpush1.msra.mxu0 %v47
    %71 = vmatprep.subr.mxu0 0.0
    %72 = vmatpush1.msra.mxu0 %v48
    %73 = vmatprep.subr.mxu0 0.0
    %74 = vmatpush1.msra.mxu0 %v49
    %75 = vmatprep.subr.mxu0 0.0
    %76 = vmatpush1.msra.mxu0 %v50
    %77 = vmatprep.subr.mxu0 0.0
    %78 = vmatpush1.msra.mxu0 %v51
    %79 = vmatprep.subr.mxu0 0.0
    %80 = vmatpush1.msra.mxu0 %v52
    %81 = vmatprep.subr.mxu0 0.0
    %82 = vmatpush1.msra.mxu0 %v53
    %83 = vmatprep.subr.mxu0 0.0
    %84 = vmatpush1.msra.mxu0 %v54
    %85 = vmatprep.subr.mxu0 0.0
    %86 = vmatpush1.msra.mxu0 %v55
    %87 = vmatprep.subr.mxu0 0.0
    %88 = vmatpush1.msra.mxu0 %v56
    %89 = vmatprep.subr.mxu0 0.0
    %90 = vmatpush1.msra.mxu0 %v57
    %91 = vmatprep.subr.mxu0 0.0
    %92 = vmatpush1.msra.mxu0 %v58
    %93 = vmatprep.subr.mxu0 0.0
    %94 = vmatpush1.msra.mxu0 0.0
    %95 = vmatprep.subr.mxu0 0.0
    %96 = vmatpush1.msra.mxu0 0.0
    %97 = vmatprep.subr.mxu0 0.0
    %98 = vmatpush1.msra.mxu0 0.0
    %99 = vmatprep.subr.mxu0 0.0
    %100 = vmatpush1.msra.mxu0 0.0
    %101 = vmatprep.subr.mxu0 0.0
    %102 = vmatpush1.msra.mxu0 0.0
    %103 = vmatprep.subr.mxu0 0.0
    %104 = vmatpush1.msra.mxu0 0.0
    %105 = vmatprep.subr.mxu0 0.0
    %106 = vmatpush1.msra.mxu0 0.0
    %107 = vmatprep.subr.mxu0 0.0
    %108 = vmatpush1.msra.mxu0 0.0
    %109 = vmatprep.subr.mxu0 0.0
    %110 = vmatpush1.msra.mxu0 0.0
    %111 = vmatprep.subr.mxu0 0.0
    %112 = vmatpush1.msra.mxu0 0.0
    %113 = vmatprep.subr.mxu0 0.0
    %114 = vmatpush1.msra.mxu0 0.0
    %115 = vmatprep.subr.mxu0 0.0
    %116 = vmatpush1.msra.mxu0 0.0
    %117 = vmatprep.subr.mxu0 0.0
    %118 = vmatpush1.msra.mxu0 0.0
    %119 = vmatprep.subr.mxu0 0.0
    %120 = vmatpush1.msra.mxu0 0.0
    %121 = vmatprep.subr.mxu0 0.0
    %122 = vmatpush1.msra.mxu0 0.0
    %123 = vmatprep.subr.mxu0 0.0
    %124 = vmatpush1.msra.mxu0 0.0
    %125 = vmatprep.mubr.f32.mxu0 0.0
    %126 = vmatmul.mubr.f32.gmra.mrb[0].mxu0 %v42
    %v127 = vpop.f32.mrb[0].mxu0
    %v128 = vadd.f32 %v60, %v127
    %v129 = vpop.f32.mrb[0].mxu0
    %130 = vdwg.mxu0
    %v131 = vxor.u32 %v128, 2147483648
    %v132 = vmul.f32 %v131, 1.442695
    %v133 = vpow.pop %v132
    %v134 = vadd.f32 %v133, 1.0
    %v135 = vrcp.pop %v134
    %v136 = vmul.f32 1.0, %v135
    %vm137 = vcmask 25600
    %138 = vst.msk [vmem:[#allocation8] sm:$0x3] %vm137, %v136
    // Predicated region
    $region22: #{plain_lr_forward.1} parent=1 // pred_check
      _
    $region23: #{plain_lr_forward.1} parent=1 // pred_check_branch
      %140 = sbr.rel (0) target = $region25
    $region24: #{plain_lr_forward.1} parent=1 // pred_region
      %s142 = ssub.s32 32, 32
      %143 = vsyncadd [#allocation5], %s142
      %s145 = sshll.u32 [#allocation8], 4
      %s146 = int_to_ptr.vmem [resolvable:$true] %s145
      %148 = dma.vmem_to_hbm [thread:$0]  %s146, 32, %s3, [#allocation5]
    $region25: #{plain_lr_forward.1} parent=1 // pred_fallthru
      _
    // Predicated region
    $region26: #{plain_lr_forward.1} parent=1 // pred_check
      _
    $region27: #{plain_lr_forward.1} parent=1 // pred_check_branch
      %150 = sbr.rel (0) target = $region29
    $region28: #{plain_lr_forward.1} parent=1 // pred_region
      %151 = dma.done [#allocation5], 32
    $region29: #{plain_lr_forward.1} parent=1 // pred_fallthru
      _
    %152 = vsyncpa [#allocation4], 1
    %153 = vsyncpa [#allocation7], 1
    %154 = vsyncpa [#allocation5], 1

</llo_original>
